<compile_context>
chip_gen: v6e
topology: v6e:2x2x1
jax: 0.10.0
libtpu: 0.0.40
codegen_flags: <defaults>
</compile_context>

<pallas_src>
import functools

import jax
import jax.numpy as jnp
from jax.experimental import pallas as pl
from jax.experimental.pallas import tpu as pltpu


# ---------------------------------------------------------------------------
# Kernel
# ---------------------------------------------------------------------------
def discriminator_kernel(x_ref, w1_ref, b1_ref, w2_ref, b2_ref, w3_ref, b3_ref,
                         out_ref):
    # Layer 1: Linear(input_dim, 256) + LeakyReLU(0.2)      (MXU + VPU max)
    h1 = jnp.dot(x_ref[...], w1_ref[...], preferred_element_type=jnp.float32)
    h1 = h1 + b1_ref[...]
    h1 = jnp.maximum(h1, 0.2 * h1)          # leaky_relu(x) == max(x, 0.2*x)

    # Layer 2: Linear(256, 128) + LeakyReLU(0.2)
    h2 = jnp.dot(h1, w2_ref[...], preferred_element_type=jnp.float32)
    h2 = h2 + b2_ref[...]
    h2 = jnp.maximum(h2, 0.2 * h2)

    # Layer 3: Linear(128, 1) + Sigmoid, computed lane-dense on a 128-wide
    # zero-padded weight so the store is a full-vreg unmasked vst.
    logits = jnp.dot(h2, w3_ref[...], preferred_element_type=jnp.float32)
    logits = logits + b3_ref[...]
    out_ref[...] = jax.nn.sigmoid(logits).astype(out_ref.dtype)


# ---------------------------------------------------------------------------
# Wrapper
# ---------------------------------------------------------------------------
@jax.jit
def discriminator_forward(x, params):
    """x: [B, input_dim] f32  ->  [B, 1] f32 (sigmoid probabilities)."""
    B, D = x.shape
    f32 = jnp.float32

    # Batch tiling: sublane-align the batch; up to 512 rows per grid step so
    # large batches amortize per-step overhead, tiny batches pad to >= 8 rows.
    if B <= 8:
        bm = 8
    else:
        bm = min(512, ((B + 7) // 8) * 8)
    Bp = ((B + bm - 1) // bm) * bm
    xp = x if Bp == B else jnp.zeros((Bp, D), f32).at[:B].set(x)
    grid = (Bp // bm,)

    const = lambda i: (0, 0)  # weights/biases: same VMEM-resident block per step

    out_padded = pl.pallas_call(
        discriminator_kernel,
        out_shape=jax.ShapeDtypeStruct((Bp, 128), f32),
        grid=grid,
        in_specs=[
            pl.BlockSpec((bm, D), lambda i: (i, 0)),     # x tile
            pl.BlockSpec((D, 256), const),               # w1
            pl.BlockSpec((1, 256), const),               # b1
            pl.BlockSpec((256, 128), const),             # w2
            pl.BlockSpec((1, 128), const),               # b2
            pl.BlockSpec((128, 128), const),             # w3 (lane-padded)
            pl.BlockSpec((1, 128), const),               # b3 (lane-padded)
        ],
        out_specs=pl.BlockSpec((bm, 128), lambda i: (i, 0)),
        compiler_params=pltpu.CompilerParams(
            dimension_semantics=("parallel",)),
    )(xp, params["w1"], params["b1"], params["w2"], params["b2"],
      params["w3_padded"], params["b3_padded"])

    # Only column 0 of the lane-dense block is meaningful; rest is sigmoid(0).
    return out_padded[:B, :1]


# ---------------------------------------------------------------------------
# Params / reference
# ---------------------------------------------------------------------------
def init_params(key, input_dim):
    """Deterministic synthetic parameters (shapes match the PyTorch module)."""
    ks = jax.random.split(key, 6)

    def lin(kw, kb, fan_in, fan_out):
        bound = 1.0 / jnp.sqrt(fan_in)
        w = jax.random.uniform(kw, (fan_in, fan_out), jnp.float32, -bound, bound)
        b = jax.random.uniform(kb, (1, fan_out), jnp.float32, -bound, bound)
        return w, b

    w1, b1 = lin(ks[0], ks[1], input_dim, 256)
    w2, b2 = lin(ks[2], ks[3], 256, 128)
    w3, b3 = lin(ks[4], ks[5], 128, 1)

    # Pre-pad the final (128, 1) layer to a lane-dense (128, 128) block once,
    # so the forward pass does no per-call padding work.
    w3_padded = jnp.zeros((128, 128), jnp.float32).at[:, :1].set(w3)
    b3_padded = jnp.zeros((1, 128), jnp.float32).at[:, :1].set(b3)

    return dict(w1=w1, b1=b1, w2=w2, b2=b2, w3=w3, b3=b3,
                w3_padded=w3_padded, b3_padded=b3_padded)


def discriminator_reference(x, params):
    """Pure-JAX reference of the PyTorch forward pass."""
    h = x @ params["w1"] + params["b1"]
    h = jnp.where(h > 0, h, 0.2 * h)
    h = h @ params["w2"] + params["b2"]
    h = jnp.where(h > 0, h, 0.2 * h)
    logits = h @ params["w3"] + params["b3"]
    return jax.nn.sigmoid(logits)


# ---------------------------------------------------------------------------
# Demo / check
# ---------------------------------------------------------------------------
if __name__ == "__main__":
    key = jax.random.PRNGKey(0)
    k_x, k_p = jax.random.split(key, 2)

    B, input_dim = 8, 32
    x = jax.random.normal(k_x, (B, input_dim), jnp.float32)
    params = init_params(k_p, input_dim)

    y = discriminator_forward(x, params)
    jax.block_until_ready(y)

    y_ref = discriminator_reference(x, params)
    assert y.shape == (B, 1)
    assert jnp.allclose(y, y_ref, atol=1e-5, rtol=1e-5)

    print("KERNEL_OK")
</pallas_src>

<mosaic_0001>
module attributes {stable_mosaic.version = 11 : i64} {
  func.func @discriminator_kernel(%arg0: i32, %arg1: memref<8x32xf32, #tpu.memory_space<vmem>>, %arg2: memref<32x256xf32, #tpu.memory_space<vmem>>, %arg3: memref<1x256xf32, #tpu.memory_space<vmem>>, %arg4: memref<256x128xf32, #tpu.memory_space<vmem>>, %arg5: memref<1x128xf32, #tpu.memory_space<vmem>>, %arg6: memref<128x128xf32, #tpu.memory_space<vmem>>, %arg7: memref<1x128xf32, #tpu.memory_space<vmem>>, %arg8: memref<8x128xf32, #tpu.memory_space<vmem>>) attributes {dimension_semantics = [#tpu.dimension_semantics<parallel>], iteration_bounds = array<i64: 1>, scalar_prefetch = 0 : i64, scratch_operands = 0 : i64, tpu.core_type = #tpu.core_type<tc>, window_params = [{transform_indices = @transform_0, window_bounds = array<i64: 8, 32>}, {pipeline_mode = #tpu.pipeline_mode<synchronous>, transform_indices = @transform_1, window_bounds = array<i64: 32, 256>}, {pipeline_mode = #tpu.pipeline_mode<synchronous>, transform_indices = @transform_2, window_bounds = array<i64: 1, 256>}, {pipeline_mode = #tpu.pipeline_mode<synchronous>, transform_indices = @transform_3, window_bounds = array<i64: 256, 128>}, {pipeline_mode = #tpu.pipeline_mode<synchronous>, transform_indices = @transform_4, window_bounds = array<i64: 1, 128>}, {pipeline_mode = #tpu.pipeline_mode<synchronous>, transform_indices = @transform_5, window_bounds = array<i64: 128, 128>}, {pipeline_mode = #tpu.pipeline_mode<synchronous>, transform_indices = @transform_6, window_bounds = array<i64: 1, 128>}, {transform_indices = @transform_7, window_bounds = array<i64: 8, 128>}]} {
    %c0 = arith.constant 0 : index
    %c0_0 = arith.constant 0 : index
    %0 = vector.load %arg1[%c0, %c0_0] : memref<8x32xf32, #tpu.memory_space<vmem>>, vector<8x32xf32>
    %c0_1 = arith.constant 0 : index
    %c0_2 = arith.constant 0 : index
    %1 = vector.load %arg2[%c0_1, %c0_2] : memref<32x256xf32, #tpu.memory_space<vmem>>, vector<32x256xf32>
    %cst = arith.constant dense<0.000000e+00> : vector<8x256xf32>
    %2 = tpu.matmul %0, %1, %cst {dimension_numbers = #tpu.dot_dimension_numbers<[1], [0], [0], [1], [0, 0, 1, 1], [], []>} : vector<8x32xf32>, vector<32x256xf32>, vector<8x256xf32> -> vector<8x256xf32>
    %c0_3 = arith.constant 0 : index
    %c0_4 = arith.constant 0 : index
    %3 = vector.load %arg3[%c0_3, %c0_4] : memref<1x256xf32, #tpu.memory_space<vmem>>, vector<1x256xf32>
    %4 = vector.broadcast %3 : vector<1x256xf32> to vector<8x256xf32>
    %5 = arith.addf %2, %4 : vector<8x256xf32>
    %cst_5 = arith.constant 2.000000e-01 : f32
    %6 = vector.broadcast %cst_5 : f32 to vector<8x256xf32>
    %7 = arith.mulf %6, %5 : vector<8x256xf32>
    %8 = arith.maximumf %5, %7 : vector<8x256xf32>
    %c0_6 = arith.constant 0 : index
    %c0_7 = arith.constant 0 : index
    %9 = vector.load %arg4[%c0_6, %c0_7] : memref<256x128xf32, #tpu.memory_space<vmem>>, vector<256x128xf32>
    %cst_8 = arith.constant dense<0.000000e+00> : vector<8x128xf32>
    %10 = tpu.matmul %8, %9, %cst_8 {dimension_numbers = #tpu.dot_dimension_numbers<[1], [0], [0], [1], [0, 0, 1, 1], [], []>} : vector<8x256xf32>, vector<256x128xf32>, vector<8x128xf32> -> vector<8x128xf32>
    %c0_9 = arith.constant 0 : index
    %c0_10 = arith.constant 0 : index
    %11 = vector.load %arg5[%c0_9, %c0_10] : memref<1x128xf32, #tpu.memory_space<vmem>>, vector<1x128xf32>
    %12 = vector.broadcast %11 : vector<1x128xf32> to vector<8x128xf32>
    %13 = arith.addf %10, %12 : vector<8x128xf32>
    %cst_11 = arith.constant 2.000000e-01 : f32
    %14 = vector.broadcast %cst_11 : f32 to vector<8x128xf32>
    %15 = arith.mulf %14, %13 : vector<8x128xf32>
    %16 = arith.maximumf %13, %15 : vector<8x128xf32>
    %c0_12 = arith.constant 0 : index
    %c0_13 = arith.constant 0 : index
    %17 = vector.load %arg6[%c0_12, %c0_13] : memref<128x128xf32, #tpu.memory_space<vmem>>, vector<128x128xf32>
    %cst_14 = arith.constant dense<0.000000e+00> : vector<8x128xf32>
    %18 = tpu.matmul %16, %17, %cst_14 {dimension_numbers = #tpu.dot_dimension_numbers<[1], [0], [0], [1], [0, 0, 1, 1], [], []>} : vector<8x128xf32>, vector<128x128xf32>, vector<8x128xf32> -> vector<8x128xf32>
    %c0_15 = arith.constant 0 : index
    %c0_16 = arith.constant 0 : index
    %19 = vector.load %arg7[%c0_15, %c0_16] : memref<1x128xf32, #tpu.memory_space<vmem>>, vector<1x128xf32>
    %20 = vector.broadcast %19 : vector<1x128xf32> to vector<8x128xf32>
    %21 = arith.addf %18, %20 : vector<8x128xf32>
    %22 = arith.negf %21 : vector<8x128xf32>
    %23 = math.exp %22 : vector<8x128xf32>
    %cst_17 = arith.constant 1.000000e+00 : f32
    %24 = vector.broadcast %cst_17 : f32 to vector<8x128xf32>
    %25 = arith.addf %24, %23 : vector<8x128xf32>
    %26 = arith.divf %24, %25 : vector<8x128xf32>
    %c0_18 = arith.constant 0 : index
    %c0_19 = arith.constant 0 : index
    %27 = vector.load %arg8[%c0_18, %c0_19] : memref<8x128xf32, #tpu.memory_space<vmem>>, vector<8x128xf32>
    tpu.vector_store %arg8[%c0_18, %c0_19], %26 {strides = array<i32>} : memref<8x128xf32, #tpu.memory_space<vmem>>, vector<8x128xf32>,
    return
  }
  func.func @transform_0(%arg0: i32) -> (i32, i32) {
    %c0_i32 = arith.constant 0 : i32
    %c0_i32_0 = arith.constant 0 : i32
    return %arg0, %c0_i32 : i32, i32
  }
  func.func @transform_1(%arg0: i32) -> (i32, i32) {
    %c0_i32 = arith.constant 0 : i32
    %c0_i32_0 = arith.constant 0 : i32
    %c0_i32_1 = arith.constant 0 : i32
    return %c0_i32, %c0_i32_0 : i32, i32
  }
  func.func @transform_2(%arg0: i32) -> (i32, i32) {
    %c0_i32 = arith.constant 0 : i32
    %c0_i32_0 = arith.constant 0 : i32
    %c0_i32_1 = arith.constant 0 : i32
    return %c0_i32, %c0_i32_0 : i32, i32
  }
  func.func @transform_3(%arg0: i32) -> (i32, i32) {
    %c0_i32 = arith.constant 0 : i32
    %c0_i32_0 = arith.constant 0 : i32
    %c0_i32_1 = arith.constant 0 : i32
    return %c0_i32, %c0_i32_0 : i32, i32
  }
  func.func @transform_4(%arg0: i32) -> (i32, i32) {
    %c0_i32 = arith.constant 0 : i32
    %c0_i32_0 = arith.constant 0 : i32
    %c0_i32_1 = arith.constant 0 : i32
    return %c0_i32, %c0_i32_0 : i32, i32
  }
  func.func @transform_5(%arg0: i32) -> (i32, i32) {
    %c0_i32 = arith.constant 0 : i32
    %c0_i32_0 = arith.constant 0 : i32
    %c0_i32_1 = arith.constant 0 : i32
    return %c0_i32, %c0_i32_0 : i32, i32
  }
  func.func @transform_6(%arg0: i32) -> (i32, i32) {
    %c0_i32 = arith.constant 0 : i32
    %c0_i32_0 = arith.constant 0 : i32
    %c0_i32_1 = arith.constant 0 : i32
    return %c0_i32, %c0_i32_0 : i32, i32
  }
  func.func @transform_7(%arg0: i32) -> (i32, i32) {
    %c0_i32 = arith.constant 0 : i32
    %c0_i32_0 = arith.constant 0 : i32
    return %arg0, %c0_i32 : i32, i32
  }
}

</mosaic_0001>

<llo_original>
// kernel: discriminator_forward.1
$region0: #{discriminator_forward.1}
  #allocation0 [shape = 'u32[]', space=smem, size = 0x4, offset = 0x4, fixed_abs, tag = 'smem constant byte address 0x4 - core index']
  #allocation1 [shape = 'u32[144,128]{1,0:T(1,128)}', space=vmem, size = 0x12000, scoped, tag = 'internal scratch']
  %s0 = inlined_call_operand.hbm [shape: f32[8,32], index: 0, kind: input, shape index: {}]
  %s1 = inlined_call_operand.hbm [shape: f32[32,256], index: 1, kind: input, shape index: {}]
  %s2 = inlined_call_operand.hbm [shape: f32[1,256], index: 2, kind: input, shape index: {}]
  %s3 = inlined_call_operand.hbm [shape: f32[256,128], index: 3, kind: input, shape index: {}]
  %s4 = inlined_call_operand.vmem [shape: f32[1,128], index: 4, kind: input, shape index: {}]
  %s5 = inlined_call_operand.hbm [shape: f32[128,128], index: 5, kind: input, shape index: {}]
  %s6 = inlined_call_operand.vmem [shape: f32[1,128], index: 6, kind: input, shape index: {}]
  %s7 = inlined_call_operand.vmem [shape: f32[8,128], index: 7, kind: output, shape index: {}]
  %s8 = sld [smem:[#allocation0]]
  $region58: #{discriminator_forward.1} parent=0
    _
  %s10 = ssub.s32 1, %s8
  %s11 = scalar_select 0, %s10, %s8
  $region1: #{discriminator_forward.1} parent=0
    #allocation2 [shape = 'u8[4096]{0}', space=vmem, size = 0x1000, scoped, tag = 'input window, operand 0, single buffered']
    #allocation3 [shape = 's32[1]{0}', space=sflag, size = 0x4, scoped, tag = 'scoped memory for discriminator_forward.1']
    #allocation4 [shape = 'u8[32768]{0}', space=vmem, size = 0x8000, scoped, tag = 'input window, operand 1, single buffered']
    #allocation5 [shape = 's32[1]{0}', space=sflag, size = 0x4, scoped, tag = 'scoped memory for discriminator_forward.1']
    #allocation6 [shape = 'u8[1024]{0}', space=vmem, size = 0x400, scoped, tag = 'input window, operand 2, single buffered']
    #allocation7 [shape = 'u8[131072]{0}', space=vmem, size = 0x20000, scoped, tag = 'input window, operand 3, single buffered']
    #allocation8 [shape = 's32[1]{0}', space=sflag, size = 0x4, scoped, tag = 'scoped memory for discriminator_forward.1']
    #allocation9 [shape = 'u8[65536]{0}', space=vmem, size = 0x10000, scoped, tag = 'input window, operand 5, single buffered']
    %12 = vsyncpa [#allocation3], 0
    %13 = vsyncpa [#allocation5], 0
    %14 = vsyncpa [#allocation8], 0
    // Predicated region
    $region2: #{discriminator_forward.1} parent=1 // pred_check
      _
    $region3: #{discriminator_forward.1} parent=1 // pred_check_branch
      %16 = sbr.rel (0) target = $region5
    $region4: #{discriminator_forward.1} parent=1 // pred_region
      %s18 = ssub.s32 128, 128
      %19 = vsyncadd [#allocation3], %s18
      %s21 = sshll.u32 [#allocation2], 4
      %s22 = int_to_ptr.vmem [resolvable:$true] %s21
      %24 = dma.hbm_to_vmem [thread:$0]  %s0, 128, %s22, [#allocation3]
    $region5: #{discriminator_forward.1} parent=1 // pred_fallthru
      _
    // Predicated region
    $region6: #{discriminator_forward.1} parent=1 // pred_check
      _
    $region7: #{discriminator_forward.1} parent=1 // pred_check_branch
      %26 = sbr.rel (0) target = $region9
    $region8: #{discriminator_forward.1} parent=1 // pred_region
      %s28 = ssub.s32 1024, 1024
      %29 = vsyncadd [#allocation5], %s28
      %s30 = sshll.u32 [#allocation4], 4
      %s31 = int_to_ptr.vmem [resolvable:$true] %s30
      %36 = dma.hbm_to_vmem [thread:$0]  %s1, 1024, %s31, [#allocation5], 256, 256, 16
    $region9: #{discriminator_forward.1} parent=1 // pred_fallthru
      _
    // Predicated region
    $region10: #{discriminator_forward.1} parent=1 // pred_check
      _
    $region11: #{discriminator_forward.1} parent=1 // pred_check_branch
      %38 = sbr.rel (0) target = $region13
    $region12: #{discriminator_forward.1} parent=1 // pred_region
      %s40 = ssub.s32 32, 32
      %41 = vsyncadd [#allocation5], %s40
      %s43 = sshll.u32 [#allocation6], 4
      %s44 = int_to_ptr.vmem [resolvable:$true] %s43
      %46 = dma.hbm_to_vmem [thread:$0]  %s2, 32, %s44, [#allocation5]
    $region13: #{discriminator_forward.1} parent=1 // pred_fallthru
      _
    // Predicated region
    $region14: #{discriminator_forward.1} parent=1 // pred_check
      _
    $region15: #{discriminator_forward.1} parent=1 // pred_check_branch
      %48 = sbr.rel (0) target = $region17
    $region16: #{discriminator_forward.1} parent=1 // pred_region
      %s50 = ssub.s32 4096, 4096
      %51 = vsyncadd [#allocation8], %s50
      %s52 = sshll.u32 [#allocation7], 4
      %s53 = int_to_ptr.vmem [resolvable:$true] %s52
      %58 = dma.hbm_to_vmem [thread:$0]  %s3, 4096, %s53, [#allocation8], 128, 128, 8
    $region17: #{discriminator_forward.1} parent=1 // pred_fallthru
      _
    // Predicated region
    $region18: #{discriminator_forward.1} parent=1 // pred_check
      _
    $region19: #{discriminator_forward.1} parent=1 // pred_check_branch
      %60 = sbr.rel (0) target = $region21
    $region20: #{discriminator_forward.1} parent=1 // pred_region
      _
    $region21: #{discriminator_forward.1} parent=1 // pred_fallthru
      _
    // Predicated region
    $region22: #{discriminator_forward.1} parent=1 // pred_check
      _
    $region23: #{discriminator_forward.1} parent=1 // pred_check_branch
      %62 = sbr.rel (0) target = $region25
    $region24: #{discriminator_forward.1} parent=1 // pred_region
      %s64 = ssub.s32 2048, 2048
      %65 = vsyncadd [#allocation8], %s64
      %s66 = sshll.u32 [#allocation9], 4
      %s67 = int_to_ptr.vmem [resolvable:$true] %s66
      %72 = dma.hbm_to_vmem [thread:$0]  %s5, 2048, %s67, [#allocation8], 128, 128, 8
    $region25: #{discriminator_forward.1} parent=1 // pred_fallthru
      _
    // Predicated region
    $region26: #{discriminator_forward.1} parent=1 // pred_check
      _
    $region27: #{discriminator_forward.1} parent=1 // pred_check_branch
      %74 = sbr.rel (0) target = $region29
    $region28: #{discriminator_forward.1} parent=1 // pred_region
      _
    $region29: #{discriminator_forward.1} parent=1 // pred_fallthru
      _
    // Predicated region
    $region30: #{discriminator_forward.1} parent=1 // pred_check
      _
    $region31: #{discriminator_forward.1} parent=1 // pred_check_branch
      %76 = sbr.rel (0) target = $region33
    $region32: #{discriminator_forward.1} parent=1 // pred_region
      %77 = dma.done [#allocation3], 128
    $region33: #{discriminator_forward.1} parent=1 // pred_fallthru
      _
    // Predicated region
    $region34: #{discriminator_forward.1} parent=1 // pred_check
      _
    $region35: #{discriminator_forward.1} parent=1 // pred_check_branch
      %79 = sbr.rel (0) target = $region37
    $region36: #{discriminator_forward.1} parent=1 // pred_region
      %80 = dma.done [#allocation5], 1024
    $region37: #{discriminator_forward.1} parent=1 // pred_fallthru
      _
    // Predicated region
    $region38: #{discriminator_forward.1} parent=1 // pred_check
      _
    $region39: #{discriminator_forward.1} parent=1 // pred_check_branch
      %82 = sbr.rel (0) target = $region41
    $region40: #{discriminator_forward.1} parent=1 // pred_region
      %83 = dma.done [#allocation5], 32
    $region41: #{discriminator_forward.1} parent=1 // pred_fallthru
      _
    // Predicated region
    $region42: #{discriminator_forward.1} parent=1 // pred_check
      _
    $region43: #{discriminator_forward.1} parent=1 // pred_check_branch
      %85 = sbr.rel (0) target = $region45
    $region44: #{discriminator_forward.1} parent=1 // pred_region
      %86 = dma.done [#allocation8], 4096
    $region45: #{discriminator_forward.1} parent=1 // pred_fallthru
      _
    // Predicated region
    $region46: #{discriminator_forward.1} parent=1 // pred_check
      _
    $region47: #{discriminator_forward.1} parent=1 // pred_check_branch
      %88 = sbr.rel (0) target = $region49
    $region48: #{discriminator_forward.1} parent=1 // pred_region
      %89 = dma.done [#allocation8], 2048
    $region49: #{discriminator_forward.1} parent=1 // pred_fallthru
      _
    %v90 = vld [vmem:[#allocation2] sm:$0xff]
    %v91 = vld [vmem:[#allocation4] sm:$0xff]
    %v92 = vld [vmem:[#allocation4 + $0x8] sm:$0xff]
    %v93 = vld [vmem:[#allocation4 + $0x10] sm:$0xff]
    %v94 = vld [vmem:[#allocation4 + $0x18] sm:$0xff]
    %v95 = vld [vmem:[#allocation4 + $0x20] sm:$0xff]
    %v96 = vld [vmem:[#allocation4 + $0x28] sm:$0xff]
    %v97 = vld [vmem:[#allocation4 + $0x30] sm:$0xff]
    %v98 = vld [vmem:[#allocation4 + $0x38] sm:$0xff]
    %v99 = vld [vmem:[#allocation6] sm:$0x3]
    %v101 = vlaneseq
    %v102 = vshrl.u32 %v101, 7
    %v103 = vsub.s32 0, %v102
    %v104 = vrot.slane %v99, %v103
    %v105 = vlaneseq
    %v106 = vshrl.u32 %v105, 7
    %v107 = vsub.s32 1, %v106
    %v108 = vrot.slane %v99, %v107
    %vm111 = vcmask 261120
    %v113 = vsel %vm111, %v90, 0
    %115 = vmatprep.subr.mxu0 0.0
    %116 = vmatpush1.msra.mxu0 0.0
    %117 = vmatprep.subr.mxu0 0.0
    %118 = vmatpush1.msra.mxu0 0.0
    %119 = vmatprep.subr.mxu0 0.0
    %120 = vmatpush1.msra.mxu0 0.0
    %121 = vmatprep.subr.mxu0 0.0
    %122 = vmatpush1.msra.mxu0 0.0
    %123 = vmatprep.subr.mxu0 0.0
    %124 = vmatpush1.msra.mxu0 0.0
    %125 = vmatprep.subr.mxu0 0.0
    %126 = vmatpush1.msra.mxu0 0.0
    %127 = vmatprep.subr.mxu0 0.0
    %128 = vmatpush1.msra.mxu0 0.0
    %129 = vmatprep.subr.mxu0 0.0
    %130 = vmatpush1.msra.mxu0 0.0
    %131 = vmatprep.subr.mxu0 0.0
    %132 = vmatpush1.msra.mxu0 0.0
    %133 = vmatprep.subr.mxu0 0.0
    %134 = vmatpush1.msra.mxu0 0.0
    %135 = vmatprep.subr.mxu0 0.0
    %136 = vmatpush1.msra.mxu0 0.0
    %137 = vmatprep.subr.mxu0 0.0
    %138 = vmatpush1.msra.mxu0 0.0
    %139 = vmatprep.subr.mxu0 %v98
    %140 = vmatpush1.msra.mxu0 %v97
    %141 = vmatprep.subr.mxu0 %v96
    %142 = vmatpush1.msra.mxu0 %v95
    %143 = vmatprep.subr.mxu0 %v94
    %144 = vmatpush1.msra.mxu0 %v93
    %145 = vmatprep.subr.mxu0 %v92
    %146 = vmatpush1.msra.mxu0 %v91
    %147 = vmatprep.subr.mxu0 0.0
    %148 = vmatpush2.msra.mxu0 0.0
    %149 = vmatprep.subr.mxu0 0.0
    %150 = vmatpush2.msra.mxu0 0.0
    %151 = vmatprep.subr.mxu0 0.0
    %152 = vmatpush2.msra.mxu0 0.0
    %153 = vmatprep.subr.mxu0 0.0
    %154 = vmatpush2.msra.mxu0 0.0
    %155 = vmatprep.subr.mxu0 0.0
    %156 = vmatpush2.msra.mxu0 0.0
    %157 = vmatprep.subr.mxu0 0.0
    %158 = vmatpush2.msra.mxu0 0.0
    %159 = vmatprep.subr.mxu0 0.0
    %160 = vmatpush2.msra.mxu0 0.0
    %161 = vmatprep.subr.mxu0 0.0
    %162 = vmatpush2.msra.mxu0 0.0
    %163 = vmatprep.subr.mxu0 0.0
    %164 = vmatpush2.msra.mxu0 0.0
    %165 = vmatprep.subr.mxu0 0.0
    %166 = vmatpush2.msra.mxu0 0.0
    %167 = vmatprep.subr.mxu0 0.0
    %168 = vmatpush2.msra.mxu0 0.0
    %169 = vmatprep.subr.mxu0 0.0
    %170 = vmatpush2.msra.mxu0 0.0
    %171 = vmatprep.subr.mxu0 0.0
    %172 = vmatpush2.msra.mxu0 0.0
    %173 = vmatprep.subr.mxu0 0.0
    %174 = vmatpush2.msra.mxu0 0.0
    %175 = vmatprep.subr.mxu0 0.0
    %176 = vmatpush2.msra.mxu0 0.0
    %177 = vmatprep.subr.mxu0 0.0
    %178 = vmatpush2.msra.mxu0 0.0
    %179 = vmatprep.mubr.f32.mxu0 0.0
    %180 = vmatmul.mubr.f32.gmra.mxu0 %v113
    %v181 = vpop.f32.mrf.mxu0
    %v182 = vadd.f32 %v104, %v181
    %v183 = vpop.f32.mrf.mxu0
    %v184 = vadd.f32 %v108, %v183
    %185 = vdwg.mxu0
    %v186 = vmul.f32 %v182, 0.2
    %v187 = vmul.f32 %v184, 0.2
    %v188 = vmax.f32 %v182, %v186
    %v189 = vmax.f32 %v184, %v187
    %v190 = vld [vmem:[#allocation7] sm:$0xff]
    %v191 = vld [vmem:[#allocation7 + $0x8] sm:$0xff]
    %v192 = vld [vmem:[#allocation7 + $0x10] sm:$0xff]
    %v193 = vld [vmem:[#allocation7 + $0x18] sm:$0xff]
    %v194 = vld [vmem:[#allocation7 + $0x20] sm:$0xff]
    %v195 = vld [vmem:[#allocation7 + $0x28] sm:$0xff]
    %v196 = vld [vmem:[#allocation7 + $0x30] sm:$0xff]
    %v197 = vld [vmem:[#allocation7 + $0x38] sm:$0xff]
    %v198 = vld [vmem:[#allocation7 + $0x40] sm:$0xff]
    %v199 = vld [vmem:[#allocation7 + $0x48] sm:$0xff]
    %v200 = vld [vmem:[#allocation7 + $0x50] sm:$0xff]
    %v201 = vld [vmem:[#allocation7 + $0x58] sm:$0xff]
    %v202 = vld [vmem:[#allocation7 + $0x60] sm:$0xff]
    %v203 = vld [vmem:[#allocation7 + $0x68] sm:$0xff]
    %v204 = vld [vmem:[#allocation7 + $0x70] sm:$0xff]
    %v205 = vld [vmem:[#allocation7 + $0x78] sm:$0xff]
    %v206 = vld [vmem:[#allocation7 + $0x80] sm:$0xff]
    %v207 = vld [vmem:[#allocation7 + $0x88] sm:$0xff]
    %v208 = vld [vmem:[#allocation7 + $0x90] sm:$0xff]
    %v209 = vld [vmem:[#allocation7 + $0x98] sm:$0xff]
    %v210 = vld [vmem:[#allocation7 + $0xa0] sm:$0xff]
    %v211 = vld [vmem:[#allocation7 + $0xa8] sm:$0xff]
    %v212 = vld [vmem:[#allocation7 + $0xb0] sm:$0xff]
    %v213 = vld [vmem:[#allocation7 + $0xb8] sm:$0xff]
    %v214 = vld [vmem:[#allocation7 + $0xc0] sm:$0xff]
    %v215 = vld [vmem:[#allocation7 + $0xc8] sm:$0xff]
    %v216 = vld [vmem:[#allocation7 + $0xd0] sm:$0xff]
    %v217 = vld [vmem:[#allocation7 + $0xd8] sm:$0xff]
    %v218 = vld [vmem:[#allocation7 + $0xe0] sm:$0xff]
    %v219 = vld [vmem:[#allocation7 + $0xe8] sm:$0xff]
    %v220 = vld [vmem:[#allocation7 + $0xf0] sm:$0xff]
    %v221 = vld [vmem:[#allocation7 + $0xf8] sm:$0xff]
    %v222 = vld [vmem:[%s4] sm:$0x1]
    %v224 = vlaneseq
    %v225 = vshrl.u32 %v224, 7
    %v226 = vsub.s32 0, %v225
    %v227 = vrot.slane %v222, %v226
    %229 = vmatprep.subr.mxu0 0.0
    %230 = vmatpush1.msra.mxu0 %v205
    %231 = vmatprep.subr.mxu0 0.0
    %232 = vmatpush1.msra.mxu0 %v204
    %233 = vmatprep.subr.mxu0 0.0
    %234 = vmatpush1.msra.mxu0 %v203
    %235 = vmatprep.subr.mxu0 0.0
    %236 = vmatpush1.msra.mxu0 %v202
    %237 = vmatprep.subr.mxu0 0.0
    %238 = vmatpush1.msra.mxu0 %v201
    %239 = vmatprep.subr.mxu0 0.0
    %240 = vmatpush1.msra.mxu0 %v200
    %241 = vmatprep.subr.mxu0 0.0
    %242 = vmatpush1.msra.mxu0 %v199
    %243 = vmatprep.subr.mxu0 0.0
    %244 = vmatpush1.msra.mxu0 %v198
    %245 = vmatprep.subr.mxu0 0.0
    %246 = vmatpush1.msra.mxu0 %v197
    %247 = vmatprep.subr.mxu0 0.0
    %248 = vmatpush1.msra.mxu0 %v196
    %249 = vmatprep.subr.mxu0 0.0
    %250 = vmatpush1.msra.mxu0 %v195
    %251 = vmatprep.subr.mxu0 0.0
    %252 = vmatpush1.msra.mxu0 %v194
    %253 = vmatprep.subr.mxu0 0.0
    %254 = vmatpush1.msra.mxu0 %v193
    %255 = vmatprep.subr.mxu0 0.0
    %256 = vmatpush1.msra.mxu0 %v192
    %257 = vmatprep.subr.mxu0 0.0
    %258 = vmatpush1.msra.mxu0 %v191
    %259 = vmatprep.subr.mxu0 0.0
    %260 = vmatpush1.msra.mxu0 %v190
    %261 = vmatprep.subr.mxu0 0.0
    %262 = vmatpush2.msra.mxu0 %v221
    %263 = vmatprep.subr.mxu0 0.0
    %264 = vmatpush2.msra.mxu0 %v220
    %265 = vmatprep.subr.mxu0 0.0
    %266 = vmatpush2.msra.mxu0 %v219
    %267 = vmatprep.subr.mxu0 0.0
    %268 = vmatpush2.msra.mxu0 %v218
    %269 = vmatprep.subr.mxu0 0.0
    %270 = vmatpush2.msra.mxu0 %v217
    %271 = vmatprep.subr.mxu0 0.0
    %272 = vmatpush2.msra.mxu0 %v216
    %273 = vmatprep.subr.mxu0 0.0
    %274 = vmatpush2.msra.mxu0 %v215
    %275 = vmatprep.subr.mxu0 0.0
    %276 = vmatpush2.msra.mxu0 %v214
    %277 = vmatprep.subr.mxu0 0.0
    %278 = vmatpush2.msra.mxu0 %v213
    %279 = vmatprep.subr.mxu0 0.0
    %280 = vmatpush2.msra.mxu0 %v212
    %281 = vmatprep.subr.mxu0 0.0
    %282 = vmatpush2.msra.mxu0 %v211
    %283 = vmatprep.subr.mxu0 0.0
    %284 = vmatpush2.msra.mxu0 %v210
    %285 = vmatprep.subr.mxu0 0.0
    %286 = vmatpush2.msra.mxu0 %v209
    %287 = vmatprep.subr.mxu0 0.0
    %288 = vmatpush2.msra.mxu0 %v208
    %289 = vmatprep.subr.mxu0 0.0
    %290 = vmatpush2.msra.mxu0 %v207
    %291 = vmatprep.subr.mxu0 0.0
    %292 = vmatpush2.msra.mxu0 %v206
    %293 = vmatprep.mubr.f32.mxu0 %v189
    %294 = vmatmul.mubr.f32.gmra.mxu0 %v188
    %v295 = vpop.f32.mrf.mxu0
    %v296 = vadd.f32 %v227, %v295
    %v297 = vpop.f32.mrf.mxu0
    %298 = vdwg.mxu0
    %v299 = vmul.f32 %v296, 0.2
    %v300 = vmax.f32 %v296, %v299
    %v301 = vld [vmem:[#allocation9] sm:$0xff]
    %v302 = vld [vmem:[#allocation9 + $0x8] sm:$0xff]
    %v303 = vld [vmem:[#allocation9 + $0x10] sm:$0xff]
    %v304 = vld [vmem:[#allocation9 + $0x18] sm:$0xff]
    %v305 = vld [vmem:[#allocation9 + $0x20] sm:$0xff]
    %v306 = vld [vmem:[#allocation9 + $0x28] sm:$0xff]
    %v307 = vld [vmem:[#allocation9 + $0x30] sm:$0xff]
    %v308 = vld [vmem:[#allocation9 + $0x38] sm:$0xff]
    %v309 = vld [vmem:[#allocation9 + $0x40] sm:$0xff]
    %v310 = vld [vmem:[#allocation9 + $0x48] sm:$0xff]
    %v311 = vld [vmem:[#allocation9 + $0x50] sm:$0xff]
    %v312 = vld [vmem:[#allocation9 + $0x58] sm:$0xff]
    %v313 = vld [vmem:[#allocation9 + $0x60] sm:$0xff]
    %v314 = vld [vmem:[#allocation9 + $0x68] sm:$0xff]
    %v315 = vld [vmem:[#allocation9 + $0x70] sm:$0xff]
    %v316 = vld [vmem:[#allocation9 + $0x78] sm:$0xff]
    %v317 = vld [vmem:[%s6] sm:$0x1]
    %v319 = vlaneseq
    %v320 = vshrl.u32 %v319, 7
    %v321 = vsub.s32 0, %v320
    %v322 = vrot.slane %v317, %v321
    %324 = vmatprep.subr.mxu0 0.0
    %325 = vmatpush1.msra.mxu0 %v316
    %326 = vmatprep.subr.mxu0 0.0
    %327 = vmatpush1.msra.mxu0 %v315
    %328 = vmatprep.subr.mxu0 0.0
    %329 = vmatpush1.msra.mxu0 %v314
    %330 = vmatprep.subr.mxu0 0.0
    %331 = vmatpush1.msra.mxu0 %v313
    %332 = vmatprep.subr.mxu0 0.0
    %333 = vmatpush1.msra.mxu0 %v312
    %334 = vmatprep.subr.mxu0 0.0
    %335 = vmatpush1.msra.mxu0 %v311
    %336 = vmatprep.subr.mxu0 0.0
    %337 = vmatpush1.msra.mxu0 %v310
    %338 = vmatprep.subr.mxu0 0.0
    %339 = vmatpush1.msra.mxu0 %v309
    %340 = vmatprep.subr.mxu0 0.0
    %341 = vmatpush1.msra.mxu0 %v308
    %342 = vmatprep.subr.mxu0 0.0
    %343 = vmatpush1.msra.mxu0 %v307
    %344 = vmatprep.subr.mxu0 0.0
    %345 = vmatpush1.msra.mxu0 %v306
    %346 = vmatprep.subr.mxu0 0.0
    %347 = vmatpush1.msra.mxu0 %v305
    %348 = vmatprep.subr.mxu0 0.0
    %349 = vmatpush1.msra.mxu0 %v304
    %350 = vmatprep.subr.mxu0 0.0
    %351 = vmatpush1.msra.mxu0 %v303
    %352 = vmatprep.subr.mxu0 0.0
    %353 = vmatpush1.msra.mxu0 %v302
    %354 = vmatprep.subr.mxu0 0.0
    %355 = vmatpush1.msra.mxu0 %v301
    %356 = vmatprep.subr.mxu0 0.0
    %357 = vmatpush2.msra.mxu0 0.0
    %358 = vmatprep.subr.mxu0 0.0
    %359 = vmatpush2.msra.mxu0 0.0
    %360 = vmatprep.subr.mxu0 0.0
    %361 = vmatpush2.msra.mxu0 0.0
    %362 = vmatprep.subr.mxu0 0.0
    %363 = vmatpush2.msra.mxu0 0.0
    %364 = vmatprep.subr.mxu0 0.0
    %365 = vmatpush2.msra.mxu0 0.0
    %366 = vmatprep.subr.mxu0 0.0
    %367 = vmatpush2.msra.mxu0 0.0
    %368 = vmatprep.subr.mxu0 0.0
    %369 = vmatpush2.msra.mxu0 0.0
    %370 = vmatprep.subr.mxu0 0.0
    %371 = vmatpush2.msra.mxu0 0.0
    %372 = vmatprep.subr.mxu0 0.0
    %373 = vmatpush2.msra.mxu0 0.0
    %374 = vmatprep.subr.mxu0 0.0
    %375 = vmatpush2.msra.mxu0 0.0
    %376 = vmatprep.subr.mxu0 0.0
    %377 = vmatpush2.msra.mxu0 0.0
    %378 = vmatprep.subr.mxu0 0.0
    %379 = vmatpush2.msra.mxu0 0.0
    %380 = vmatprep.subr.mxu0 0.0
    %381 = vmatpush2.msra.mxu0 0.0
    %382 = vmatprep.subr.mxu0 0.0
    %383 = vmatpush2.msra.mxu0 0.0
    %384 = vmatprep.subr.mxu0 0.0
    %385 = vmatpush2.msra.mxu0 0.0
    %386 = vmatprep.subr.mxu0 0.0
    %387 = vmatpush2.msra.mxu0 0.0
    %388 = vmatprep.mubr.f32.mxu0 0.0
    %389 = vmatmul.mubr.f32.gmra.mxu0 %v300
    %v390 = vpop.f32.mrf.mxu0
    %v391 = vadd.f32 %v322, %v390
    %v392 = vpop.f32.mrf.mxu0
    %393 = vdwg.mxu0
    %v394 = vxor.u32 %v391, 2147483648
    %v395 = vmul.f32 %v394, 1.442695
    %v396 = vpow.pop %v395
    %v397 = vadd.f32 %v396, 1.0
    %v398 = vrcp.pop %v397
    %v399 = vmul.f32 1.0, %v398
    %400 = vst [vmem:[%s7] sm:$0xff] %v399
    // Predicated region
    $region50: #{discriminator_forward.1} parent=1 // pred_check
      _
    $region51: #{discriminator_forward.1} parent=1 // pred_check_branch
      %402 = sbr.rel (0) target = $region53
    $region52: #{discriminator_forward.1} parent=1 // pred_region
      _
    $region53: #{discriminator_forward.1} parent=1 // pred_fallthru
      _
    // Predicated region
    $region54: #{discriminator_forward.1} parent=1 // pred_check
      _
    $region55: #{discriminator_forward.1} parent=1 // pred_check_branch
      %404 = sbr.rel (0) target = $region57
    $region56: #{discriminator_forward.1} parent=1 // pred_region
      _
    $region57: #{discriminator_forward.1} parent=1 // pred_fallthru
      _
    %405 = vsyncpa [#allocation3], 1
    %406 = vsyncpa [#allocation5], 1
    %407 = vsyncpa [#allocation8], 1

</llo_original>
